<compile_context>
chip_gen: v5e
topology: v5e:2x2
jax: 0.10.0
libtpu: 0.0.40
codegen_flags: <defaults>
</compile_context>

<pallas_src>
import jax
import jax.numpy as jnp
from jax.experimental import pallas as pl
from jax.experimental.pallas import tpu as pltpu

HIDDEN = 100          # logical hidden size (matches nn.Linear(x_dim, 100))
HIDDEN_PAD = 128      # lane-aligned padded hidden size
OUT = 1
NEG_SLOPE = 0.01      # PyTorch F.leaky_relu default
TB_MAX = 4096         # max batch-tile rows per grid step (safe on v5e/v6e/v7x)


def _round_up(n, m):
    return ((n + m - 1) // m) * m


def mux_kernel(x_ref, w1_ref, b1_ref, w2_ref, b2_ref, o_ref):
    # x_ref : [TB, D]        (pipelined HBM->VMEM tile)
    # w1_ref: [D, 128]       (VMEM resident)
    # b1_ref: [1, 128]       (VMEM resident)
    # w2_ref: [1, 128]       (VMEM resident, second layer weight as a row)
    # b2_ref: [1, 1]         (SMEM scalar)
    # o_ref : [TB, 1]
    x = x_ref[...]
    h = jnp.dot(x, w1_ref[...], preferred_element_type=jnp.float32)   # MXU
    h = h + b1_ref[...]                                               # [TB,128]
    h = jnp.where(h > 0, h, NEG_SLOPE * h)                            # leaky_relu
    # Second "matmul" (N=1) as VPU multiply + XLU row reduction.
    y = jnp.sum(h * w2_ref[...], axis=-1, keepdims=True)              # [TB,1]
    o_ref[...] = (y + b2_ref[0, 0]).astype(o_ref.dtype)


def mux_forward(x, w1, b1, w2, b2):
    """x: [B, x_dim] f32, w1: [x_dim, 100], b1: [100], w2: [100, 1], b2: [1].

    Returns [B, 1] f32 (== leaky_relu(x @ w1 + b1) @ w2 + b2).
    """
    B, D = x.shape
    x = x.astype(jnp.float32)

    # --- parameter prep: pad hidden dim 100 -> 128 (zeros are exact no-ops) ---
    w1p = jnp.zeros((D, HIDDEN_PAD), jnp.float32).at[:, :HIDDEN].set(
        w1.astype(jnp.float32))
    b1p = jnp.zeros((1, HIDDEN_PAD), jnp.float32).at[:, :HIDDEN].set(
        b1.reshape(1, HIDDEN).astype(jnp.float32))
    w2p = jnp.zeros((1, HIDDEN_PAD), jnp.float32).at[:, :HIDDEN].set(
        w2.reshape(1, HIDDEN).astype(jnp.float32))
    b2p = b2.reshape(1, 1).astype(jnp.float32)

    # --- batch tiling: pick tile, pad batch to a multiple of it ---
    tb = min(TB_MAX, _round_up(B, 8))
    b_pad = _round_up(B, tb)
    if b_pad != B:
        x = jnp.pad(x, ((0, b_pad - B), (0, 0)))
    grid = (b_pad // tb,)

    cost = pl.CostEstimate(
        flops=2 * b_pad * D * HIDDEN_PAD + 2 * b_pad * HIDDEN_PAD,
        transcendentals=0,
        bytes_accessed=4 * (b_pad * D + b_pad * OUT
                            + D * HIDDEN_PAD + 2 * HIDDEN_PAD + 1),
    )

    out = pl.pallas_call(
        mux_kernel,
        out_shape=jax.ShapeDtypeStruct((b_pad, OUT), jnp.float32),
        grid=grid,
        in_specs=[
            # x: tiled along batch, pipelined (double-buffered DMA)
            pl.BlockSpec((tb, D), lambda i: (i, 0)),
            # weights / bias: same block every step -> VMEM resident
            pl.BlockSpec((D, HIDDEN_PAD), lambda i: (0, 0)),
            pl.BlockSpec((1, HIDDEN_PAD), lambda i: (0, 0)),
            pl.BlockSpec((1, HIDDEN_PAD), lambda i: (0, 0)),
            # b2: single scalar in SMEM
            pl.BlockSpec(memory_space=pltpu.MemorySpace.SMEM),
        ],
        out_specs=pl.BlockSpec((tb, OUT), lambda i: (i, 0)),
        compiler_params=pltpu.CompilerParams(
            dimension_semantics=("parallel",)),
        cost_estimate=cost,
    )(x, w1p, b1p, w2p, b2p)

    return out[:B]


def init_params(key, x_dim):
    # Deterministic init mimicking torch.nn.Linear default (U(-1/sqrt(fan_in), ...)).
    # Weights stored transposed vs. torch so the kernel computes x @ W + b.
    k1, k2, k3, k4 = jax.random.split(key, 4)
    lim1 = 1.0 / jnp.sqrt(jnp.float32(x_dim))
    lim2 = 1.0 / jnp.sqrt(jnp.float32(HIDDEN))
    w1 = jax.random.uniform(k1, (x_dim, HIDDEN), jnp.float32, -lim1, lim1)
    b1 = jax.random.uniform(k2, (HIDDEN,), jnp.float32, -lim1, lim1)
    w2 = jax.random.uniform(k3, (HIDDEN, OUT), jnp.float32, -lim2, lim2)
    b2 = jax.random.uniform(k4, (OUT,), jnp.float32, -lim2, lim2)
    return w1, b1, w2, b2


def reference(x, w1, b1, w2, b2):
    h = x @ w1 + b1[None, :]
    h = jnp.where(h > 0, h, NEG_SLOPE * h)
    return h @ w2 + b2[None, :]


if __name__ == "__main__":
    key = jax.random.PRNGKey(0)
    kx, kp = jax.random.split(key)

    B, X_DIM = 8, 32  # small shapes consistent with the module
    x = jax.random.normal(kx, (B, X_DIM), jnp.float32)
    w1, b1, w2, b2 = init_params(kp, X_DIM)

    y = mux_forward(x, w1, b1, w2, b2)
    y = jax.block_until_ready(y)

    y_ref = reference(x, w1, b1, w2, b2)
    assert y.shape == (B, OUT)
    assert jnp.allclose(y, y_ref, atol=1e-5, rtol=1e-5)

    # Also exercise a batch that is not tile-aligned / spans multiple tiles.
    B2 = 5000
    x2 = jax.random.normal(jax.random.PRNGKey(1), (B2, X_DIM), jnp.float32)
    y2 = jax.block_until_ready(mux_forward(x2, w1, b1, w2, b2))
    assert y2.shape == (B2, OUT)
    assert jnp.allclose(y2, reference(x2, w1, b1, w2, b2), atol=1e-4, rtol=1e-4)

    print("KERNEL_OK")
</pallas_src>

<mosaic_0001>
module attributes {stable_mosaic.version = 11 : i64} {
  func.func @mux_kernel(%arg0: i32, %arg1: memref<8x32xf32, #tpu.memory_space<vmem>>, %arg2: memref<32x128xf32, #tpu.memory_space<vmem>>, %arg3: memref<1x128xf32, #tpu.memory_space<vmem>>, %arg4: memref<1x128xf32, #tpu.memory_space<vmem>>, %arg5: memref<1x1xf32, #tpu.memory_space<smem>>, %arg6: memref<8x1xf32, #tpu.memory_space<vmem>>) attributes {dimension_semantics = [#tpu.dimension_semantics<parallel>], iteration_bounds = array<i64: 1>, scalar_prefetch = 0 : i64, scratch_operands = 0 : i64, tpu.core_type = #tpu.core_type<tc>, window_params = [{transform_indices = @transform_0, window_bounds = array<i64: 8, 32>}, {pipeline_mode = #tpu.pipeline_mode<synchronous>, transform_indices = @transform_1, window_bounds = array<i64: 32, 128>}, {pipeline_mode = #tpu.pipeline_mode<synchronous>, transform_indices = @transform_2, window_bounds = array<i64: 1, 128>}, {pipeline_mode = #tpu.pipeline_mode<synchronous>, transform_indices = @transform_3, window_bounds = array<i64: 1, 128>}, {transform_indices = @transform_4, window_bounds = array<i64: 1, 1>}, {transform_indices = @transform_5, window_bounds = array<i64: 8, 1>}]} {
    %c0 = arith.constant 0 : index
    %c0_0 = arith.constant 0 : index
    %0 = vector.load %arg1[%c0, %c0_0] : memref<8x32xf32, #tpu.memory_space<vmem>>, vector<8x32xf32>
    %c0_1 = arith.constant 0 : index
    %c0_2 = arith.constant 0 : index
    %1 = vector.load %arg2[%c0_1, %c0_2] : memref<32x128xf32, #tpu.memory_space<vmem>>, vector<32x128xf32>
    %cst = arith.constant dense<0.000000e+00> : vector<8x128xf32>
    %2 = tpu.matmul %0, %1, %cst {dimension_numbers = #tpu.dot_dimension_numbers<[1], [0], [0], [1], [0, 0, 1, 1], [], []>} : vector<8x32xf32>, vector<32x128xf32>, vector<8x128xf32> -> vector<8x128xf32>
    %c0_3 = arith.constant 0 : index
    %c0_4 = arith.constant 0 : index
    %3 = vector.load %arg3[%c0_3, %c0_4] : memref<1x128xf32, #tpu.memory_space<vmem>>, vector<1x128xf32>
    %4 = vector.broadcast %3 : vector<1x128xf32> to vector<8x128xf32>
    %5 = arith.addf %2, %4 : vector<8x128xf32>
    %cst_5 = arith.constant 0.000000e+00 : f32
    %6 = vector.broadcast %cst_5 : f32 to vector<8x128xf32>
    %7 = arith.cmpf ogt, %5, %6 : vector<8x128xf32>
    %cst_6 = arith.constant 0.00999999977 : f32
    %8 = vector.broadcast %cst_6 : f32 to vector<8x128xf32>
    %9 = arith.mulf %8, %5 : vector<8x128xf32>
    %10 = arith.select %7, %5, %9 : vector<8x128xi1>, vector<8x128xf32>
    %c0_7 = arith.constant 0 : index
    %c0_8 = arith.constant 0 : index
    %11 = vector.load %arg4[%c0_7, %c0_8] : memref<1x128xf32, #tpu.memory_space<vmem>>, vector<1x128xf32>
    %12 = vector.broadcast %11 : vector<1x128xf32> to vector<8x128xf32>
    %13 = arith.mulf %10, %12 : vector<8x128xf32>
    %cst_9 = arith.constant dense<0.000000e+00> : vector<8xf32>
    %14 = vector.multi_reduction <add>, %13, %cst_9 [1] : vector<8x128xf32> to vector<8xf32>
    %15 = vector.shape_cast %14 : vector<8xf32> to vector<8x1xf32>
    %c0_10 = arith.constant 0 : index
    %c0_11 = arith.constant 0 : index
    %16 = memref.load %arg5[%c0_10, %c0_11] : memref<1x1xf32, #tpu.memory_space<smem>>
    %17 = vector.broadcast %16 : f32 to vector<8x1xf32>
    %18 = arith.addf %15, %17 : vector<8x1xf32>
    %c0_12 = arith.constant 0 : index
    %c0_13 = arith.constant 0 : index
    %19 = vector.load %arg6[%c0_12, %c0_13] : memref<8x1xf32, #tpu.memory_space<vmem>>, vector<8x1xf32>
    tpu.vector_store %arg6[%c0_12, %c0_13], %18 {strides = array<i32>} : memref<8x1xf32, #tpu.memory_space<vmem>>, vector<8x1xf32>,
    return
  }
  func.func @transform_0(%arg0: i32) -> (i32, i32) {
    %c0_i32 = arith.constant 0 : i32
    %c0_i32_0 = arith.constant 0 : i32
    return %arg0, %c0_i32 : i32, i32
  }
  func.func @transform_1(%arg0: i32) -> (i32, i32) {
    %c0_i32 = arith.constant 0 : i32
    %c0_i32_0 = arith.constant 0 : i32
    %c0_i32_1 = arith.constant 0 : i32
    return %c0_i32, %c0_i32_0 : i32, i32
  }
  func.func @transform_2(%arg0: i32) -> (i32, i32) {
    %c0_i32 = arith.constant 0 : i32
    %c0_i32_0 = arith.constant 0 : i32
    %c0_i32_1 = arith.constant 0 : i32
    return %c0_i32, %c0_i32_0 : i32, i32
  }
  func.func @transform_3(%arg0: i32) -> (i32, i32) {
    %c0_i32 = arith.constant 0 : i32
    %c0_i32_0 = arith.constant 0 : i32
    %c0_i32_1 = arith.constant 0 : i32
    return %c0_i32, %c0_i32_0 : i32, i32
  }
  func.func @transform_4(%arg0: i32) -> (i32, i32) {
    %c0_i32 = arith.constant 0 : i32
    %c0_i32_0 = arith.constant 0 : i32
    %c0_i32_1 = arith.constant 0 : i32
    return %c0_i32, %c0_i32_0 : i32, i32
  }
  func.func @transform_5(%arg0: i32) -> (i32, i32) {
    %c0_i32 = arith.constant 0 : i32
    %c0_i32_0 = arith.constant 0 : i32
    return %arg0, %c0_i32 : i32, i32
  }
}

</mosaic_0001>

<llo_original>
// kernel: tpu_custom_call.1
$region0: #{tpu_custom_call.1}
  #allocation0 [shape = 'u32[]', space=smem, size = 0x4, offset = 0x4, fixed_abs, tag = 'smem constant byte address 0x4 - core index']
  #allocation1 [shape = 'u32[72,128]{1,0:T(1,128)}', space=vmem, size = 0x9000, scoped, tag = 'internal scratch']
  #allocation2 [shape = 'f32[1,1]{1,0:T(1,128)S(6)}', space=smem, size = 0x200, scoped, tag = 'scoped memory for tpu_custom_call.1']
  %s0 = inlined_call_operand.hbm [shape: f32[8,32], index: 0, kind: input, shape index: {}]
  %s1 = inlined_call_operand.hbm [shape: f32[32,128], index: 1, kind: input, shape index: {}]
  %s2 = inlined_call_operand.vmem [shape: f32[1,128], index: 2, kind: input, shape index: {}]
  %s3 = inlined_call_operand.vmem [shape: f32[1,128], index: 3, kind: input, shape index: {}]
  %s4 = inlined_call_operand.<no memory space> [shape: f32[1,1], index: 4, kind: input, shape index: {}]
  %s5 = inlined_call_operand.vmem [shape: f32[8,1], index: 5, kind: output, shape index: {}]
  %s6 = sld [smem:[#allocation0]]
  $region38: #{tpu_custom_call.1} parent=0
    _
  %s8 = ssub.s32 1, %s6
  %s9 = scalar_select 0, %s8, %s6
  %10 = sst [smem:[#allocation2]] %s4
  $region1: #{tpu_custom_call.1} parent=0
    #allocation3 [shape = 'u8[4096]{0}', space=vmem, size = 0x1000, scoped, tag = 'input window, operand 0, single buffered']
    #allocation4 [shape = 's32[1]{0}', space=sflag, size = 0x4, scoped, tag = 'scoped memory for tpu_custom_call.1']
    #allocation5 [shape = 'u8[16384]{0}', space=vmem, size = 0x4000, scoped, tag = 'input window, operand 1, single buffered']
    #allocation6 [shape = 's32[1]{0}', space=sflag, size = 0x4, scoped, tag = 'scoped memory for tpu_custom_call.1']
    %11 = vsyncpa [#allocation4], 0
    %12 = vsyncpa [#allocation6], 0
    // Predicated region
    $region2: #{tpu_custom_call.1} parent=1 // pred_check
      _
    $region3: #{tpu_custom_call.1} parent=1 // pred_check_branch
      %14 = sbr.rel (0) target = $region5
    $region4: #{tpu_custom_call.1} parent=1 // pred_region
      %16 = vsyncadd [#allocation4], 0
      %s18 = sshll.u32 %s0, 4
      %s19 = int_to_ptr.hbm [resolvable:$true] %s18
      %s20 = sshll.u32 [#allocation3], 4
      %s21 = int_to_ptr.vmem [resolvable:$true] %s20
      %23 = dma.hbm_to_vmem [thread:$0]  %s19, 128, %s21, [#allocation4]
    $region5: #{tpu_custom_call.1} parent=1 // pred_fallthru
      _
    // Predicated region
    $region6: #{tpu_custom_call.1} parent=1 // pred_check
      _
    $region7: #{tpu_custom_call.1} parent=1 // pred_check_branch
      %25 = sbr.rel (0) target = $region9
    $region8: #{tpu_custom_call.1} parent=1 // pred_region
      %27 = vsyncadd [#allocation6], 0
      %s28 = sshll.u32 %s1, 4
      %s29 = int_to_ptr.hbm [resolvable:$true] %s28
      %s30 = sshll.u32 [#allocation5], 4
      %s31 = int_to_ptr.vmem [resolvable:$true] %s30
      %36 = dma.hbm_to_vmem [thread:$0]  %s29, 512, %s31, [#allocation6], 128, 128, 8
    $region9: #{tpu_custom_call.1} parent=1 // pred_fallthru
      _
    // Predicated region
    $region10: #{tpu_custom_call.1} parent=1 // pred_check
      _
    $region11: #{tpu_custom_call.1} parent=1 // pred_check_branch
      %38 = sbr.rel (0) target = $region13
    $region12: #{tpu_custom_call.1} parent=1 // pred_region
      _
    $region13: #{tpu_custom_call.1} parent=1 // pred_fallthru
      _
    // Predicated region
    $region14: #{tpu_custom_call.1} parent=1 // pred_check
      _
    $region15: #{tpu_custom_call.1} parent=1 // pred_check_branch
      %40 = sbr.rel (0) target = $region17
    $region16: #{tpu_custom_call.1} parent=1 // pred_region
      _
    $region17: #{tpu_custom_call.1} parent=1 // pred_fallthru
      _
    // Predicated region
    $region18: #{tpu_custom_call.1} parent=1 // pred_check
      _
    $region19: #{tpu_custom_call.1} parent=1 // pred_check_branch
      %42 = sbr.rel (0) target = $region21
    $region20: #{tpu_custom_call.1} parent=1 // pred_region
      _
    $region21: #{tpu_custom_call.1} parent=1 // pred_fallthru
      _
    // Predicated region
    $region22: #{tpu_custom_call.1} parent=1 // pred_check
      _
    $region23: #{tpu_custom_call.1} parent=1 // pred_check_branch
      %44 = sbr.rel (0) target = $region25
    $region24: #{tpu_custom_call.1} parent=1 // pred_region
      %46 = dma.done [#allocation4], 128
    $region25: #{tpu_custom_call.1} parent=1 // pred_fallthru
      _
    // Predicated region
    $region26: #{tpu_custom_call.1} parent=1 // pred_check
      _
    $region27: #{tpu_custom_call.1} parent=1 // pred_check_branch
      %48 = sbr.rel (0) target = $region29
    $region28: #{tpu_custom_call.1} parent=1 // pred_region
      %50 = dma.done [#allocation6], 512
    $region29: #{tpu_custom_call.1} parent=1 // pred_fallthru
      _
    %v51 = vld [vmem:[#allocation3] sm:$0xff]
    %v52 = vld [vmem:[#allocation5] sm:$0xff]
    %v53 = vld [vmem:[#allocation5 + $0x8] sm:$0xff]
    %v54 = vld [vmem:[#allocation5 + $0x10] sm:$0xff]
    %v55 = vld [vmem:[#allocation5 + $0x18] sm:$0xff]
    %v56 = vld [vmem:[%s2] sm:$0x1]
    %v58 = vperm.slane %v56, 0
    %vm60 = vcmask 261120
    %v62 = vsel %vm60, %v51, 0
    %64 = vmatpush.msra.mxu0 0.0
    %65 = vmatpush.msra.mxu0 0.0
    %66 = vmatpush.msra.mxu0 0.0
    %67 = vmatpush.msra.mxu0 0.0
    %68 = vmatpush.msra.mxu0 0.0
    %69 = vmatpush.msra.mxu0 0.0
    %70 = vmatpush.msra.mxu0 0.0
    %71 = vmatpush.msra.mxu0 0.0
    %72 = vmatpush.msra.mxu0 0.0
    %73 = vmatpush.msra.mxu0 0.0
    %74 = vmatpush.msra.mxu0 0.0
    %75 = vmatpush.msra.mxu0 0.0
    %76 = vmatpush.msra.mxu0 %v55
    %77 = vmatpush.msra.mxu0 %v54
    %78 = vmatpush.msra.mxu0 %v53
    %79 = vmatpush.msra.mxu0 %v52
    %80 = vmatmul.f32.gmra.mxu0 %v62
    %v81 = vpop.f32.mrf.mxu0
    %v82 = vadd.f32 %v58, %v81
    %83 = vdwg.mxu0
    %vm84 = vcmp.gt.f32.partialorder %v82, 0.0
    %v85 = vmul.f32 %v82, 0.01
    %v86 = vsel %vm84, %v82, %v85
    %v87 = vld [vmem:[%s3] sm:$0x1]
    %v89 = vperm.slane %v87, 0
    %v91 = vmul.f32 %v86, %v89
    %92 = vadd.xlane.f32.xlu0 %v91
    %v93 = vpop.xlane.xlu0 %92
    %s94 = sld [smem:[#allocation2]]
    %v95 = vstv %s94
    %v96 = vadd.f32 %v93, %v95
    %vm97 = vcmask 7168
    %98 = vst.msk [vmem:[%s5] sm:$0xff] %vm97, %v96
    // Predicated region
    $region30: #{tpu_custom_call.1} parent=1 // pred_check
      _
    $region31: #{tpu_custom_call.1} parent=1 // pred_check_branch
      %100 = sbr.rel (0) target = $region33
    $region32: #{tpu_custom_call.1} parent=1 // pred_region
      _
    $region33: #{tpu_custom_call.1} parent=1 // pred_fallthru
      _
    // Predicated region
    $region34: #{tpu_custom_call.1} parent=1 // pred_check
      _
    $region35: #{tpu_custom_call.1} parent=1 // pred_check_branch
      %102 = sbr.rel (0) target = $region37
    $region36: #{tpu_custom_call.1} parent=1 // pred_region
      _
    $region37: #{tpu_custom_call.1} parent=1 // pred_fallthru
      _
    %103 = vsyncpa [#allocation4], 1
    %104 = vsyncpa [#allocation6], 1

</llo_original>
